<compile_context>
chip_gen: v6e
topology: v6e:2x2x1
jax: 0.10.0
libtpu: 0.0.40
codegen_flags: <defaults>
</compile_context>

<pallas_src>
import functools

import jax
import jax.numpy as jnp
from jax.experimental import pallas as pl
from jax.experimental.pallas import tpu as pltpu


def _label_smoothing_kernel(pred_ref, tgt_ref, out_ref, acc_ref,
                            *, confidence, uniform):
    i = pl.program_id(1)  # row-tile index within this split (reduction axis)

    @pl.when(i == 0)
    def _():
        acc_ref[...] = jnp.zeros_like(acc_ref)

    x = pred_ref[...].astype(jnp.float32)                 # (tile_n, C)

    # Stable log-sum-exp pieces.
    m = jnp.max(x, axis=-1, keepdims=True)                # (tile_n, 1)
    z = x - m                                             # (tile_n, C)
    lse = jnp.log(jnp.sum(jnp.exp(z), axis=-1, keepdims=True))  # (tile_n, 1)

    # Smoothed-target weights via iota/compare (no one-hot materialized):
    #   w = confidence + smoothing/C at the target class, smoothing/C elsewhere.
    cls = jax.lax.broadcasted_iota(jnp.int32, x.shape, 1)
    w = jnp.where(cls == tgt_ref[...], confidence + uniform, uniform)
    wz = jnp.sum(w * z, axis=-1, keepdims=True)           # (tile_n, 1)

    # Per-row loss = lse - sum(w * z); accumulate as a vector (no scalar RMW).
    acc_ref[...] += lse - wz

    @pl.when(i == pl.num_programs(1) - 1)
    def _():
        partial = jnp.sum(acc_ref[...], axis=0, keepdims=True)      # (1, 1)
        lane = jax.lax.broadcasted_iota(jnp.int32, (1, 128), 1)
        # Lane-dense (1, 128) output block: partial sum in lane 0, zeros else.
        out_ref[...] = jnp.where(lane == 0, partial, 0.0)


def _pick_tile_n(n, c, itemsize, target_bytes):
    """Largest row-tile dividing n with tile_n*c*itemsize <= target_bytes."""
    max_rows = max(1, target_bytes // (c * itemsize))
    if n <= max_rows:
        return n                      # full batch in one block
    tile = (max_rows // 8) * 8        # prefer sublane-aligned tiles
    while tile >= 8:
        if n % tile == 0:
            return tile
        tile -= 8
    for t in range(min(n, max_rows), 0, -1):   # fallback: any divisor
        if n % t == 0:
            return t
    return n


def label_smoothing_loss(pred, target, *, smoothing=0.1,
                         max_block_bytes=1 << 20):
    """pred: (N, C) float (f32 or bf16), target: (N,) int. Scalar f32 loss."""
    n, c = pred.shape
    itemsize = jnp.dtype(pred.dtype).itemsize
    tile_n = _pick_tile_n(n, c, itemsize, max_block_bytes)
    n_tiles = n // tile_n

    # Two-way split of the row-tile axis -> "parallel" leading grid axis so
    # v7x can shard the streaming reduction across its 2 TensorCores.
    num_splits = 2 if (n_tiles >= 2 and n_tiles % 2 == 0) else 1
    tiles_per_split = n_tiles // num_splits

    confidence = 1.0 - smoothing
    uniform = smoothing / c
    tgt2d = target.astype(jnp.int32).reshape(n, 1)

    kernel = functools.partial(
        _label_smoothing_kernel, confidence=confidence, uniform=uniform)

    partials = pl.pallas_call(
        kernel,
        out_shape=jax.ShapeDtypeStruct((1, 128 * num_splits), jnp.float32),
        grid_spec=pltpu.PrefetchScalarGridSpec(
            num_scalar_prefetch=0,
            grid=(num_splits, tiles_per_split),
            in_specs=[
                pl.BlockSpec((tile_n, c),
                             lambda s, i: (s * tiles_per_split + i, 0)),
                pl.BlockSpec((tile_n, 1),
                             lambda s, i: (s * tiles_per_split + i, 0)),
            ],
            out_specs=pl.BlockSpec((1, 128), lambda s, i: (0, s)),
            scratch_shapes=[pltpu.VMEM((tile_n, 1), jnp.float32)],
        ),
        compiler_params=pltpu.CompilerParams(
            dimension_semantics=("parallel", "arbitrary"),
            vmem_limit_bytes=48 * 1024 * 1024,
        ),
    )(pred, tgt2d)

    # Combine per-split partial sums (only lane 0 of each 128-lane chunk is
    # nonzero) and take the mean over rows.
    return jnp.sum(partials) / n


def _reference(pred, target, smoothing):
    logp = jax.nn.log_softmax(pred.astype(jnp.float32), axis=-1)
    c = pred.shape[-1]
    true_dist = (jax.nn.one_hot(target, c, dtype=jnp.float32) * (1.0 - smoothing)
                 + smoothing / c)
    return jnp.mean(jnp.sum(-true_dist * logp, axis=-1))


if __name__ == "__main__":
    key = jax.random.PRNGKey(0)
    k1, k2, k3, k4 = jax.random.split(key, 4)
    smoothing = 0.1

    # Test 1: tiny shape (single tile, single split), f32.
    N1, C1 = 8, 128
    pred1 = jax.random.normal(k1, (N1, C1), dtype=jnp.float32)
    tgt1 = jax.random.randint(k2, (N1,), 0, C1, dtype=jnp.int32)
    loss1 = jax.block_until_ready(
        label_smoothing_loss(pred1, tgt1, smoothing=smoothing))
    ref1 = _reference(pred1, tgt1, smoothing)
    assert jnp.allclose(loss1, ref1, atol=1e-5, rtol=1e-5), (loss1, ref1)

    # Test 2: multi-tile + two-way parallel-split path (small block override).
    N2, C2 = 64, 128
    pred2 = jax.random.normal(k3, (N2, C2), dtype=jnp.float32)
    tgt2 = jax.random.randint(k4, (N2,), 0, C2, dtype=jnp.int32)
    loss2 = jax.block_until_ready(
        label_smoothing_loss(pred2, tgt2, smoothing=smoothing,
                             max_block_bytes=16 * C2 * 4))
    ref2 = _reference(pred2, tgt2, smoothing)
    assert jnp.allclose(loss2, ref2, atol=1e-5, rtol=1e-5), (loss2, ref2)

    # Test 3: bf16 streaming path (f32 math inside the kernel).
    pred_bf16 = pred1.astype(jnp.bfloat16)
    loss3 = jax.block_until_ready(
        label_smoothing_loss(pred_bf16, tgt1, smoothing=smoothing))
    ref3 = _reference(pred_bf16, tgt1, smoothing)
    assert jnp.allclose(loss3, ref3, atol=1e-5, rtol=1e-5), (loss3, ref3)

    print("KERNEL_OK")
</pallas_src>

<mosaic_0001>
module attributes {stable_mosaic.version = 11 : i64} {
  func.func @_label_smoothing_kernel(%arg0: i32, %arg1: i32, %arg2: memref<8x128xf32, #tpu.memory_space<vmem>>, %arg3: memref<8x1xi32, #tpu.memory_space<vmem>>, %arg4: memref<1x128xf32, #tpu.memory_space<vmem>>, %arg5: memref<8x1xf32, #tpu.memory_space<vmem>>) attributes {dimension_semantics = [#tpu.dimension_semantics<parallel>, #tpu.dimension_semantics<arbitrary>], iteration_bounds = array<i64: 1, 1>, scalar_prefetch = 0 : i64, scratch_operands = 1 : i64, tpu.core_type = #tpu.core_type<tc>, window_params = [{transform_indices = @transform_0, window_bounds = array<i64: 8, 128>}, {transform_indices = @transform_1, window_bounds = array<i64: 8, 1>}, {transform_indices = @transform_2, window_bounds = array<i64: 1, 128>}]} {
    %c0_i32 = arith.constant 0 : i32
    %0 = arith.cmpi eq, %arg1, %c0_i32 : i32
    %1 = arith.extui %0 : i1 to i32
    %c0_i32_0 = arith.constant 0 : i32
    %2 = arith.cmpi ne, %1, %c0_i32_0 : i32
    scf.if %2 {
      %cst_14 = arith.constant 0.000000e+00 : f32
      %29 = vector.broadcast %cst_14 : f32 to vector<8x1xf32>
      %c0_15 = arith.constant 0 : index
      %c0_16 = arith.constant 0 : index
      %30 = vector.load %arg5[%c0_15, %c0_16] : memref<8x1xf32, #tpu.memory_space<vmem>>, vector<8x1xf32>
      tpu.vector_store %arg5[%c0_15, %c0_16], %29 {strides = array<i32>} : memref<8x1xf32, #tpu.memory_space<vmem>>, vector<8x1xf32>,
    } else {
    }
    %c0 = arith.constant 0 : index
    %c0_1 = arith.constant 0 : index
    %3 = vector.load %arg2[%c0, %c0_1] : memref<8x128xf32, #tpu.memory_space<vmem>>, vector<8x128xf32>
    %cst = arith.constant dense<0xFF800000> : vector<8xf32>
    %4 = vector.multi_reduction <maximumf>, %3, %cst [1] : vector<8x128xf32> to vector<8xf32>
    %5 = vector.shape_cast %4 : vector<8xf32> to vector<8x1xf32>
    %6 = vector.broadcast %5 : vector<8x1xf32> to vector<8x128xf32>
    %7 = arith.subf %3, %6 : vector<8x128xf32>
    %8 = math.exp %7 : vector<8x128xf32>
    %cst_2 = arith.constant dense<0.000000e+00> : vector<8xf32>
    %9 = vector.multi_reduction <add>, %8, %cst_2 [1] : vector<8x128xf32> to vector<8xf32>
    %10 = vector.shape_cast %9 : vector<8xf32> to vector<8x1xf32>
    %11 = math.log %10 : vector<8x1xf32>
    %12 = tpu.iota {dimensions = array<i32: 1>} : vector<8x128xi32>
    %c0_3 = arith.constant 0 : index
    %c0_4 = arith.constant 0 : index
    %13 = vector.load %arg3[%c0_3, %c0_4] : memref<8x1xi32, #tpu.memory_space<vmem>>, vector<8x1xi32>
    %14 = vector.broadcast %13 : vector<8x1xi32> to vector<8x128xi32>
    %15 = arith.cmpi eq, %12, %14 : vector<8x128xi32>
    %cst_5 = arith.constant 0.900781273 : f32
    %cst_6 = arith.constant 7.812500e-04 : f32
    %16 = vector.broadcast %cst_5 : f32 to vector<8x128xf32>
    %17 = vector.broadcast %cst_6 : f32 to vector<8x128xf32>
    %18 = arith.select %15, %16, %17 : vector<8x128xi1>, vector<8x128xf32>
    %19 = arith.mulf %18, %7 : vector<8x128xf32>
    %cst_7 = arith.constant dense<0.000000e+00> : vector<8xf32>
    %20 = vector.multi_reduction <add>, %19, %cst_7 [1] : vector<8x128xf32> to vector<8xf32>
    %21 = vector.shape_cast %20 : vector<8xf32> to vector<8x1xf32>
    %c0_8 = arith.constant 0 : index
    %c0_9 = arith.constant 0 : index
    %22 = vector.load %arg5[%c0_8, %c0_9] : memref<8x1xf32, #tpu.memory_space<vmem>>, vector<8x1xf32>
    %23 = arith.subf %11, %21 : vector<8x1xf32>
    %24 = arith.addf %22, %23 : vector<8x1xf32>
    %c0_10 = arith.constant 0 : index
    %c0_11 = arith.constant 0 : index
    %25 = vector.load %arg5[%c0_10, %c0_11] : memref<8x1xf32, #tpu.memory_space<vmem>>, vector<8x1xf32>
    tpu.vector_store %arg5[%c0_10, %c0_11], %24 {strides = array<i32>} : memref<8x1xf32, #tpu.memory_space<vmem>>, vector<8x1xf32>,
    %c0_i32_12 = arith.constant 0 : i32
    %26 = arith.cmpi eq, %arg1, %c0_i32_12 : i32
    %27 = arith.extui %26 : i1 to i32
    %c0_i32_13 = arith.constant 0 : i32
    %28 = arith.cmpi ne, %27, %c0_i32_13 : i32
    scf.if %28 {
      %c0_14 = arith.constant 0 : index
      %c0_15 = arith.constant 0 : index
      %29 = vector.load %arg5[%c0_14, %c0_15] : memref<8x1xf32, #tpu.memory_space<vmem>>, vector<8x1xf32>
      %cst_16 = arith.constant dense<0.000000e+00> : vector<1xf32>
      %30 = vector.multi_reduction <add>, %29, %cst_16 [0] : vector<8x1xf32> to vector<1xf32>
      %31 = vector.shape_cast %30 : vector<1xf32> to vector<1x1xf32>
      %32 = tpu.iota {dimensions = array<i32: 1>} : vector<1x128xi32>
      %c0_i32_17 = arith.constant 0 : i32
      %33 = vector.broadcast %c0_i32_17 : i32 to vector<1x128xi32>
      %34 = arith.cmpi eq, %32, %33 : vector<1x128xi32>
      %cst_18 = arith.constant 0.000000e+00 : f32
      %35 = vector.shape_cast %31 : vector<1x1xf32> to vector<1x1xf32>
      %36 = vector.broadcast %35 : vector<1x1xf32> to vector<1x128xf32>
      %37 = vector.broadcast %cst_18 : f32 to vector<1x128xf32>
      %38 = arith.select %34, %36, %37 : vector<1x128xi1>, vector<1x128xf32>
      %c0_19 = arith.constant 0 : index
      %c0_20 = arith.constant 0 : index
      %39 = vector.load %arg4[%c0_19, %c0_20] : memref<1x128xf32, #tpu.memory_space<vmem>>, vector<1x128xf32>
      tpu.vector_store %arg4[%c0_19, %c0_20], %38 {strides = array<i32>} : memref<1x128xf32, #tpu.memory_space<vmem>>, vector<1x128xf32>,
    } else {
    }
    return
  }
  func.func @transform_0(%arg0: i32, %arg1: i32) -> (i32, i32) {
    %c1_i32 = arith.constant 1 : i32
    %0 = arith.muli %arg0, %c1_i32 : i32
    %1 = arith.addi %0, %arg1 : i32
    %c0_i32 = arith.constant 0 : i32
    %c0_i32_0 = arith.constant 0 : i32
    return %1, %c0_i32 : i32, i32
  }
  func.func @transform_1(%arg0: i32, %arg1: i32) -> (i32, i32) {
    %c1_i32 = arith.constant 1 : i32
    %0 = arith.muli %arg0, %c1_i32 : i32
    %1 = arith.addi %0, %arg1 : i32
    %c0_i32 = arith.constant 0 : i32
    %c0_i32_0 = arith.constant 0 : i32
    return %1, %c0_i32 : i32, i32
  }
  func.func @transform_2(%arg0: i32, %arg1: i32) -> (i32, i32) {
    %c0_i32 = arith.constant 0 : i32
    %c0_i32_0 = arith.constant 0 : i32
    return %c0_i32, %arg0 : i32, i32
  }
}

</mosaic_0001>

<llo_original>
// kernel: tpu_custom_call.1
$region0: #{tpu_custom_call.1}
  #allocation0 [shape = 'u32[]', space=smem, size = 0x4, offset = 0x4, fixed_abs, tag = 'smem constant byte address 0x4 - core index']
  #allocation1 [shape = 'u32[144,128]{1,0:T(1,128)}', space=vmem, size = 0x12000, scoped, tag = 'internal scratch']
  #allocation2 [shape = 'f32[8,1]{1,0:T(8,128)}', space=vmem, size = 0x1000, scoped, tag = 'scratch operand']
  %s0 = inlined_call_operand.vmem [shape: f32[8,128], index: 0, kind: input, shape index: {}]
  %s1 = inlined_call_operand.vmem [shape: s32[8,1], index: 1, kind: input, shape index: {}]
  %s2 = inlined_call_operand.hbm [shape: f32[1,128], index: 2, kind: output, shape index: {}]
  %s3 = sld [smem:[#allocation0]]
  $region26: #{tpu_custom_call.1} parent=0
    _
  %s5 = ssub.s32 1, %s3
  %s6 = scalar_select 0, %s5, %s3
  $region1: #{tpu_custom_call.1} parent=0
    #allocation3 [shape = 'u8[512]{0}', space=vmem, size = 0x400, scoped, tag = 'output window, operand 0, single buffered']
    #allocation4 [shape = 's32[1]{0}', space=sflag, size = 0x4, scoped, tag = 'scoped memory for tpu_custom_call.1']
    %7 = vsyncpa [#allocation4], 0
    // Predicated region
    $region2: #{tpu_custom_call.1} parent=1 // pred_check
      _
    $region3: #{tpu_custom_call.1} parent=1 // pred_check_branch
      %9 = sbr.rel (0) target = $region5
    $region4: #{tpu_custom_call.1} parent=1 // pred_region
      %s10 = sadd.s32 0, 0
      %p11 = scmp.lt.s32.totalorder %s10, 0
      %s12 = scalar_select %p11, %s10, 0
      %s13 = smul.addr %s12, 8
      %s14 = scalar_lea.vmem %s0, %s13
      %s15 = sadd.s32 0, 0
    $region5: #{tpu_custom_call.1} parent=1 // pred_fallthru
      _
    // Predicated region
    $region6: #{tpu_custom_call.1} parent=1 // pred_check
      _
    $region7: #{tpu_custom_call.1} parent=1 // pred_check_branch
      %17 = sbr.rel (0) target = $region9
    $region8: #{tpu_custom_call.1} parent=1 // pred_region
      %s18 = sadd.s32 0, 0
      %p19 = scmp.lt.s32.totalorder %s18, 0
      %s20 = scalar_select %p19, %s18, 0
      %s21 = smul.addr %s20, 8
      %s22 = scalar_lea.vmem %s1, %s21
      %s23 = sadd.s32 0, 0
    $region9: #{tpu_custom_call.1} parent=1 // pred_fallthru
      _
    %s24 = sadd.s32 0, 0
    %p25 = scmp.lt.s32.totalorder %s24, 0
    %s26 = scalar_select %p25, %s24, 0
    %s27 = smul.addr %s26, 8
    %s28 = scalar_lea.vmem %s0, %s27
    %s29 = sadd.s32 0, 0
    %p30 = scmp.lt.s32.totalorder %s29, 0
    %s31 = scalar_select %p30, %s29, 0
    %s32 = smul.addr %s31, 8
    %s33 = scalar_lea.vmem %s1, %s32
    %s34 = sadd.s32 0, 0
    %p35 = scmp.lt.s32.totalorder %s34, 0
    %s36 = scalar_select %p35, %s34, 0
    %s37 = smul.addr %s36, 8
    %s38 = scalar_lea.vmem %s0, %s37
    %s39 = sadd.s32 0, 0
    %s40 = sadd.s32 0, 0
    %p41 = scmp.lt.s32.totalorder %s40, 0
    %s42 = scalar_select %p41, %s40, 0
    %s43 = smul.addr %s42, 8
    %s44 = scalar_lea.vmem %s1, %s43
    %s45 = sadd.s32 0, 0
    %p46 = scmp.eq.s32.totalorder 0, 0
    // Predicated region
    $region10: #{tpu_custom_call.1} parent=1 // pred_check
      %p47 = pneg %p46
    $region11: #{tpu_custom_call.1} parent=1 // pred_check_branch
      %49 = sbr.rel (%p47) target = $region13
    $region12: #{tpu_custom_call.1} parent=1 // pred_region
      %vm50 = vcmask 7168
      %51 = vst.msk [vmem:[#allocation2] sm:$0xff] %vm50, 0.0
    $region13: #{tpu_custom_call.1} parent=1 // pred_fallthru
      _
    %v52 = vld [vmem:[%s38] sm:$0xff]
    %53 = vmax.xlane.f32.xlu0 %v52
    %v54 = vpop.xlane.xlu0 %53
    %v55 = vsub.f32 %v52, %v54
    %v56 = vmul.f32 %v55, 1.442695
    %v57 = vpow.pop %v56
    %58 = vadd.xlane.f32.xlu0 %v57
    %v59 = vpop.xlane.xlu0 %58
    %v60 = vlog2.pop %v59
    %v61 = vmul.f32 %v60, 0.6931472
    %v62 = vlaneseq
    %v63 = vand.u32 %v62, 127
    %v64 = vld [vmem:[%s44] sm:$0xff]
    %65 = vset.pattern.permute.xlu0 0
    %66 = vperm.xlu0 %65, %v64
    %v67 = vpop.permute.xlu0 %66
    %vm68 = vcmp.eq.s32.totalorder %v63, %v67
    %v69 = vsel %vm68, 0.9007813, 0.00078125
    %v70 = vmul.f32 %v69, %v55
    %71 = vadd.xlane.f32.xlu0 %v70
    %v72 = vpop.xlane.xlu0 %71
    %v73 = vld [vmem:[#allocation2] sm:$0xff]
    %v74 = vsub.f32 %v61, %v72
    %v75 = vadd.f32 %v73, %v74
    %vm76 = vcmask 7168
    %77 = vst.msk [vmem:[#allocation2] sm:$0xff] %vm76, %v75
    // Predicated region
    $region14: #{tpu_custom_call.1} parent=1 // pred_check
      %p78 = pneg %p46
    $region15: #{tpu_custom_call.1} parent=1 // pred_check_branch
      %80 = sbr.rel (%p78) target = $region17
    $region16: #{tpu_custom_call.1} parent=1 // pred_region
      %v81 = vld [vmem:[#allocation2] sm:$0xff]
      %v82 = vsel %vm76, %v81, 0.0
      %v83 = vrot.slane %v82, 4
      %v84 = vadd.f32 %v82, %v83
      %v85 = vrot.slane %v84, 2
      %v86 = vadd.f32 %v84, %v85
      %v87 = vrot.slane %v86, 1
      %v88 = vadd.f32 %v86, %v87
      %vm89 = vcmp.eq.s32.totalorder %v63, 0
      %91 = vset.pattern.permute.xlu0 0
      %92 = vperm.xlu0 %91, %v88
      %v93 = vpop.permute.xlu0 %92
      %v95 = vsel %vm89, %v93, 0.0
      %96 = vst [vmem:[#allocation3] sm:$0x1] %v95
    $region17: #{tpu_custom_call.1} parent=1 // pred_fallthru
      _
    // Predicated region
    $region18: #{tpu_custom_call.1} parent=1 // pred_check
      _
    $region19: #{tpu_custom_call.1} parent=1 // pred_check_branch
      %98 = sbr.rel (0) target = $region21
    $region20: #{tpu_custom_call.1} parent=1 // pred_region
      %s100 = ssub.s32 16, 16
      %101 = vsyncadd [#allocation4], %s100
      %s103 = sshll.u32 [#allocation3], 4
      %s104 = int_to_ptr.vmem [resolvable:$true] %s103
      %106 = dma.vmem_to_hbm [thread:$0]  %s104, 16, %s2, [#allocation4]
    $region21: #{tpu_custom_call.1} parent=1 // pred_fallthru
      _
    // Predicated region
    $region22: #{tpu_custom_call.1} parent=1 // pred_check
      _
    $region23: #{tpu_custom_call.1} parent=1 // pred_check_branch
      %108 = sbr.rel (0) target = $region25
    $region24: #{tpu_custom_call.1} parent=1 // pred_region
      %109 = dma.done [#allocation4], 16
    $region25: #{tpu_custom_call.1} parent=1 // pred_fallthru
      _
    %110 = vsyncpa [#allocation4], 1

</llo_original>
